<compile_context>
chip_gen: v7x
topology: tpu7x:2x2x1
jax: 0.10.0
libtpu: 0.0.40
codegen_flags: <defaults>
</compile_context>

<pallas_src>
import functools

import jax
import jax.numpy as jnp
from jax import lax
from jax.experimental import pallas as pl
from jax.experimental.pallas import tpu as pltpu


def _round_up(x, m):
    return (x + m - 1) // m * m


def _vmem_cap_bytes():
    """Per-generation usable VMEM budget: physical capacity minus headroom."""
    cap = 64 << 20  # conservative fallback (v7x per-TC physical VMEM)
    try:
        info = pltpu.get_tpu_info()
        cap = int(getattr(info, "vmem_capacity_bytes", cap))
    except Exception:
        pass
    return max(cap - (16 << 20), 16 << 20)


# ----------------------------------------------------------------------------
# Path A: small vocab -- table resident in a single-buffered VMEM scratch,
# per-tile gather as a one-hot MXU matmul.
# ----------------------------------------------------------------------------
def _embed_onehot_kernel(ids_ref, table_hbm, out_ref, table_vmem, load_sem):
    """ids_ref   : VMEM [tile, 1] int32 (this tile's clamped token ids)
       table_hbm : HBM  [V, H]          (memory_space=pl.ANY)
       out_ref   : VMEM [tile, H]
       table_vmem: VMEM [V, H] scratch  (persists across grid steps)
       load_sem  : DMA semaphore [1]
    """
    # Load the table from HBM exactly once; grid axis is "arbitrary" so the
    # grid runs sequentially and every later step sees the filled scratch.
    @pl.when(pl.program_id(0) == 0)
    def _():
        cp = pltpu.make_async_copy(table_hbm, table_vmem, load_sem.at[0])
        cp.start()
        cp.wait()

    tile = out_ref.shape[0]
    v = table_vmem.shape[0]
    tab = table_vmem[...]
    # onehot[t, v] = (ids[t] == v); exactly one 1.0 per row -> exact gather.
    onehot = (lax.broadcasted_iota(jnp.int32, (tile, v), 1)
              == ids_ref[...]).astype(tab.dtype)
    out_ref[...] = jnp.dot(
        onehot, tab, preferred_element_type=jnp.float32).astype(out_ref.dtype)


# ----------------------------------------------------------------------------
# Path B: large vocab -- table stays in HBM; per-row async-copy gather directly
# into the output tile with a sliding window of `n_inflight` DMAs.
# ----------------------------------------------------------------------------
def _embed_dma_gather_kernel(ids_ref, table_hbm, out_ref, copy_sems, *,
                             tile, n_inflight):
    """ids_ref   : SMEM [T_pad] int32   (all clamped token ids)
       table_hbm : HBM  [V, H]          (memory_space=pl.ANY)
       out_ref   : VMEM [tile, H]
       copy_sems : DMA semaphores [n_inflight]
    """
    base = pl.program_id(0) * tile

    def row_copy(t, slot_t):
        row = ids_ref[base + t]
        return pltpu.make_async_copy(
            table_hbm.at[pl.ds(row, 1), :],
            out_ref.at[pl.ds(t, 1), :],
            copy_sems.at[slot_t % n_inflight],
        )

    prime = min(n_inflight, tile)

    # Prime up to n_inflight row copies.
    @pl.loop(0, prime)
    def _(t):
        row_copy(t, t).start()

    # Steady state: drain the slot we are about to reuse, then issue the next.
    if tile > n_inflight:
        @pl.loop(n_inflight, tile)
        def _(t):
            row_copy(t - n_inflight, t).wait()   # copy (t - n_inflight)
            row_copy(t, t).start()

    # Drain the remaining in-flight copies before the output tile is written back.
    @pl.loop(tile - prime, tile)
    def _(t):
        row_copy(t, t).wait()


# ----------------------------------------------------------------------------
# Wrapper
# ----------------------------------------------------------------------------
def embedding_forward(input_ids, table, *, tok_tile=256, n_inflight=8,
                      onehot_max_vocab=1024):
    """input_ids: int [B, S]; table: [V, H] -> [B, S, H] (dtype of table)."""
    B, S = input_ids.shape
    V, H = table.shape
    T = B * S
    itemsize = jnp.dtype(table.dtype).itemsize

    # Clamp ids: Mosaic does not bounds-check, so this is the only OOB guard.
    flat_ids = jnp.clip(input_ids.reshape(T).astype(jnp.int32), 0, V - 1)

    # Sublane-aligned token tile: 8 (f32) / 16 (bf16) / 32 (int8).
    sub = max(8, 32 // itemsize)
    tile = _round_up(min(tok_tile, _round_up(T, sub)), sub)
    t_pad = _round_up(T, tile)
    if t_pad != T:
        flat_ids = jnp.pad(flat_ids, (0, t_pad - T))  # pad with row 0 (valid)
    num_tiles = t_pad // tile

    vmem_cap = _vmem_cap_bytes()
    out_bytes2 = 2 * tile * H * itemsize  # double-buffered output tile
    # Single-buffered resident table (scratch) + out tiles + ids + onehot/iota temps.
    resident_bytes = (V * H * itemsize + out_bytes2 + 2 * tile * 4
                      + tile * V * 8 + (2 << 20))
    use_onehot = (V <= onehot_max_vocab
                  and resident_bytes <= vmem_cap
                  and jnp.issubdtype(table.dtype, jnp.floating))

    out_shape = jax.ShapeDtypeStruct((t_pad, H), table.dtype)
    out_spec = pl.BlockSpec((tile, H), lambda i: (i, 0))
    table_spec = pl.BlockSpec(memory_space=pl.ANY)  # table stays in HBM

    if use_onehot:
        ids_col = flat_ids.reshape(t_pad, 1)
        out_flat = pl.pallas_call(
            _embed_onehot_kernel,
            out_shape=out_shape,
            grid=(num_tiles,),
            in_specs=[pl.BlockSpec((tile, 1), lambda i: (i, 0)), table_spec],
            out_specs=out_spec,
            scratch_shapes=[pltpu.VMEM((V, H), table.dtype),
                            pltpu.SemaphoreType.DMA((1,))],
            compiler_params=pltpu.CompilerParams(
                # "arbitrary": sequential grid -> one-time table load on step 0
                # is visible to all steps and never duplicated per core (v7x).
                dimension_semantics=("arbitrary",),
                vmem_limit_bytes=int(min(max(resident_bytes, 32 << 20), vmem_cap)),
            ),
        )(ids_col, table)
    else:
        n_flight = max(1, min(n_inflight, tile))
        gather_bytes = out_bytes2 + (2 << 20)
        # TODO(synk): for very long prefill (T >~ 64K) deliver ids as per-tile
        # SMEM blocks (pl.BlockSpec((tile,), lambda i: (i,), memory_space=SMEM))
        # instead of one whole-array SMEM buffer, to cap SMEM usage.
        out_flat = pl.pallas_call(
            functools.partial(_embed_dma_gather_kernel,
                              tile=tile, n_inflight=n_flight),
            out_shape=out_shape,
            grid=(num_tiles,),
            in_specs=[pl.BlockSpec(memory_space=pltpu.MemorySpace.SMEM),
                      table_spec],
            out_specs=out_spec,
            scratch_shapes=[pltpu.SemaphoreType.DMA((n_flight,))],
            compiler_params=pltpu.CompilerParams(
                dimension_semantics=("parallel",),  # independent token tiles
                vmem_limit_bytes=int(min(max(gather_bytes, 32 << 20), vmem_cap)),
            ),
        )(flat_ids, table)

    return out_flat[:T].reshape(B, S, H)


if __name__ == "__main__":
    key = jax.random.PRNGKey(0)
    k_tab, k_ids, k_tab2, k_ids2 = jax.random.split(key, 4)

    B, S = 2, 8  # batch, sequence length

    # 1) Small vocab -> resident-table + one-hot MXU path.
    V, H = 64, 128
    table = jax.random.normal(k_tab, (V, H), dtype=jnp.float32)
    input_ids = jax.random.randint(k_ids, (B, S), 0, V, dtype=jnp.int32)
    out = jax.block_until_ready(embedding_forward(input_ids, table))
    ref = jnp.take(table, input_ids, axis=0)
    assert out.shape == (B, S, H), out.shape
    assert out.dtype == table.dtype, out.dtype
    assert jnp.allclose(out, ref), "mismatch vs reference gather (one-hot path)"

    # 2) Larger vocab -> HBM-resident table + per-row DMA-gather path.
    V2, H2 = 4096, 128
    table2 = jax.random.normal(k_tab2, (V2, H2), dtype=jnp.float32)
    input_ids2 = jax.random.randint(k_ids2, (B, S), 0, V2, dtype=jnp.int32)
    out2 = jax.block_until_ready(embedding_forward(input_ids2, table2))
    ref2 = jnp.take(table2, input_ids2, axis=0)
    assert out2.shape == (B, S, H2), out2.shape
    assert jnp.allclose(out2, ref2), "mismatch vs reference gather (DMA path)"

    print("KERNEL_OK")
</pallas_src>

<mosaic_0001>
module attributes {stable_mosaic.version = 11 : i64} {
  func.func @_embed_onehot_kernel(%arg0: i32, %arg1: memref<16x1xi32, #tpu.memory_space<vmem>>, %arg2: memref<64x128xf32, #tpu.memory_space<any>>, %arg3: memref<16x128xf32, #tpu.memory_space<vmem>>, %arg4: memref<64x128xf32, #tpu.memory_space<vmem>>, %arg5: memref<1x!tpu.dma_semaphore, #tpu.memory_space<semaphore_mem>>) attributes {dimension_semantics = [#tpu.dimension_semantics<arbitrary>], iteration_bounds = array<i64: 1>, scalar_prefetch = 0 : i64, scratch_operands = 2 : i64, tpu.core_type = #tpu.core_type<tc>, window_params = [{transform_indices = @transform_0, window_bounds = array<i64: 16, 1>}, {}, {transform_indices = @transform_2, window_bounds = array<i64: 16, 128>}]} {
    %c0_i32 = arith.constant 0 : i32
    %0 = arith.cmpi eq, %arg0, %c0_i32 : i32
    %1 = arith.extui %0 : i1 to i32
    %c0_i32_0 = arith.constant 0 : i32
    %2 = arith.cmpi ne, %1, %c0_i32_0 : i32
    scf.if %2 {
      %c0_i32_6 = arith.constant 0 : i32
      %12 = tpu.memref_slice %arg5[%c0_i32_6] : memref<1x!tpu.dma_semaphore, #tpu.memory_space<semaphore_mem>> -> memref<1x!tpu.dma_semaphore, #tpu.memory_space<semaphore_mem>>
      %13 = tpu.memref_squeeze %12 : memref<1x!tpu.dma_semaphore, #tpu.memory_space<semaphore_mem>> -> memref<!tpu.dma_semaphore, #tpu.memory_space<semaphore_mem>>
      tpu.enqueue_dma source(%arg2 : memref<64x128xf32, #tpu.memory_space<any>>) target(%arg4 : memref<64x128xf32, #tpu.memory_space<vmem>>) target_semaphore(%13 : memref<!tpu.dma_semaphore, #tpu.memory_space<semaphore_mem>>)
      %c0_i32_7 = arith.constant 0 : i32
      %14 = tpu.memref_slice %arg5[%c0_i32_7] : memref<1x!tpu.dma_semaphore, #tpu.memory_space<semaphore_mem>> -> memref<1x!tpu.dma_semaphore, #tpu.memory_space<semaphore_mem>>
      %15 = tpu.memref_squeeze %14 : memref<1x!tpu.dma_semaphore, #tpu.memory_space<semaphore_mem>> -> memref<!tpu.dma_semaphore, #tpu.memory_space<semaphore_mem>>
      tpu.wait_dma2 semaphore(%15 : memref<!tpu.dma_semaphore, #tpu.memory_space<semaphore_mem>>) src(%arg2 : memref<64x128xf32, #tpu.memory_space<any>>) dst(%arg4 : memref<64x128xf32, #tpu.memory_space<vmem>>)
    } else {
    }
    %c0 = arith.constant 0 : index
    %c0_1 = arith.constant 0 : index
    %3 = vector.load %arg4[%c0, %c0_1] : memref<64x128xf32, #tpu.memory_space<vmem>>, vector<64x128xf32>
    %4 = tpu.iota {dimensions = array<i32: 1>} : vector<16x64xi32>
    %c0_2 = arith.constant 0 : index
    %c0_3 = arith.constant 0 : index
    %5 = vector.load %arg1[%c0_2, %c0_3] : memref<16x1xi32, #tpu.memory_space<vmem>>, vector<16x1xi32>
    %6 = vector.broadcast %5 : vector<16x1xi32> to vector<16x64xi32>
    %7 = arith.cmpi eq, %4, %6 : vector<16x64xi32>
    %8 = arith.extui %7 : vector<16x64xi1> to vector<16x64xi32>
    %9 = arith.sitofp %8 : vector<16x64xi32> to vector<16x64xf32>
    %cst = arith.constant dense<0.000000e+00> : vector<16x128xf32>
    %10 = tpu.matmul %9, %3, %cst {dimension_numbers = #tpu.dot_dimension_numbers<[1], [0], [0], [1], [0, 0, 1, 1], [], []>} : vector<16x64xf32>, vector<64x128xf32>, vector<16x128xf32> -> vector<16x128xf32>
    %c0_4 = arith.constant 0 : index
    %c0_5 = arith.constant 0 : index
    %11 = vector.load %arg3[%c0_4, %c0_5] : memref<16x128xf32, #tpu.memory_space<vmem>>, vector<16x128xf32>
    tpu.vector_store %arg3[%c0_4, %c0_5], %10 {strides = array<i32>} : memref<16x128xf32, #tpu.memory_space<vmem>>, vector<16x128xf32>,
    return
  }
  func.func @transform_0(%arg0: i32) -> (i32, i32) {
    %c0_i32 = arith.constant 0 : i32
    %c0_i32_0 = arith.constant 0 : i32
    return %arg0, %c0_i32 : i32, i32
  }
  func.func @transform_2(%arg0: i32) -> (i32, i32) {
    %c0_i32 = arith.constant 0 : i32
    %c0_i32_0 = arith.constant 0 : i32
    return %arg0, %c0_i32 : i32, i32
  }
}

</mosaic_0001>

<llo_original>
// kernel: tpu_custom_call.1
$region0: #{tpu_custom_call.1}
  #allocation0 [shape = 'u32[]', space=smem, size = 0x4, offset = 0x4, fixed_abs, tag = 'smem constant byte address 0x4 - core index']
  #allocation1 [shape = 'u32[144,128]{1,0:T(1,128)}', space=vmem, size = 0x12000, scoped, tag = 'internal scratch']
  #allocation2 [shape = 'f32[64,128]{1,0:T(8,128)}', space=vmem, size = 0x8000, scoped, tag = 'scratch operand']
  #allocation3 [shape = 's32[1]{0}', space=sflag, size = 0x4, scoped, tag = 'scratch operand']
  #allocation6 [shape = 's32[]', space=sflag, size = 0x4, offset = 0, fixed_abs, tag = 'sflag constant byte address 0x0 - dummy sync flag']
  #allocation7 [shape = 's32[]', space=sflag, size = 0x4, offset = 0, fixed_abs, tag = 'sflag constant byte address 0x0 - dummy sync flag']
  #allocation8 [shape = 'u32[]', space=smem, size = 0x4, offset = 0x44, fixed_abs, tag = 'smem constant byte address 0x44 - assertion arg 0']
  #allocation9 [shape = 'u32[]', space=smem, size = 0x4, offset = 0x48, fixed_abs, tag = 'smem constant byte address 0x48 - assertion arg 1']
  %s0 = inlined_call_operand.vmem [shape: s32[16,1], index: 0, kind: input, shape index: {}]
  %s1 = inlined_call_operand.hbm [shape: f32[64,128], index: 1, kind: input, shape index: {}]
  %s2 = inlined_call_operand.hbm [shape: f32[16,128], index: 2, kind: output, shape index: {}]
  %s3 = sld [smem:[#allocation0]]
  $region22: #{tpu_custom_call.1} parent=0
    _
  %s5 = ssub.s32 1, %s3
  %s6 = scalar_select 0, %s5, %s3
  $region1: #{tpu_custom_call.1} parent=0
    #allocation4 [shape = 'u8[8192]{0}', space=vmem, size = 0x2000, scoped, tag = 'output window, operand 0, single buffered']
    #allocation5 [shape = 's32[1]{0}', space=sflag, size = 0x4, scoped, tag = 'scoped memory for tpu_custom_call.1']
    %7 = vsyncpa [#allocation5], 0
    // Predicated region
    $region2: #{tpu_custom_call.1} parent=1 // pred_check
      _
    $region3: #{tpu_custom_call.1} parent=1 // pred_check_branch
      %9 = sbr.rel (0) target = $region5
    $region4: #{tpu_custom_call.1} parent=1 // pred_region
      _
    $region5: #{tpu_custom_call.1} parent=1 // pred_fallthru
      _
    %p10 = scmp.eq.s32.totalorder 0, 0
    // Predicated region
    $region6: #{tpu_custom_call.1} parent=1 // pred_check
      %p11 = pneg %p10
    $region7: #{tpu_custom_call.1} parent=1 // pred_check_branch
      %13 = sbr.rel (%p11) target = $region9
    $region8: #{tpu_custom_call.1} parent=1 // pred_region
      // Predicated region
      $region10: #{tpu_custom_call.1} parent=8 // pred_check
        _
      $region11: #{tpu_custom_call.1} parent=8 // pred_check_branch
        %15 = sbr.rel target = $region13
      $region12: #{tpu_custom_call.1} parent=8 // pred_region
        %16 = sst [smem:[#allocation8]] [#allocation7]
        %17 = sst [smem:[#allocation9]] [#allocation6]
      $region13: #{tpu_custom_call.1} parent=8 // pred_fallthru
        _
      %19 = shalt.err (0)
      %s21 = sshll.u32 [#allocation2], 4
      %s22 = int_to_ptr.vmem [resolvable:$true] %s21
      %24 = dma.hbm_to_vmem [thread:$0]  %s1, 1024, %s22, [#allocation3]
      %s25 = smul.u32 64, 1
      %s26 = sshll.u32 %s25, 4
      %27 = dma.done [#allocation3], %s26
    $region9: #{tpu_custom_call.1} parent=1 // pred_fallthru
      _
    %v28 = vld [vmem:[#allocation2] sm:$0xff]
    %v29 = vld [vmem:[#allocation2 + $0x8] sm:$0xff]
    %v30 = vld [vmem:[#allocation2 + $0x10] sm:$0xff]
    %v31 = vld [vmem:[#allocation2 + $0x18] sm:$0xff]
    %v32 = vld [vmem:[#allocation2 + $0x20] sm:$0xff]
    %v33 = vld [vmem:[#allocation2 + $0x28] sm:$0xff]
    %v34 = vld [vmem:[#allocation2 + $0x30] sm:$0xff]
    %v35 = vld [vmem:[#allocation2 + $0x38] sm:$0xff]
    %v36 = vlaneseq
    %v37 = vand.u32 %v36, 127
    %v38 = vld [vmem:[%s0] sm:$0xff]
    %v39 = vld [vmem:[%s0 + $0x8] sm:$0xff]
    %40 = vset.pattern.permute.xlu0 0
    %41 = vperm.xlu0 %40, %v38
    %v42 = vpop.permute.xlu0 %41
    %43 = vset.pattern.permute.xlu0 0
    %44 = vperm.xlu0 %43, %v39
    %v45 = vpop.permute.xlu0 %44
    %vm46 = vcmp.eq.s32.totalorder %v37, %v42
    %vm47 = vcmp.eq.s32.totalorder %v37, %v45
    %v48 = vsel %vm46, 1, 0
    %v49 = vsel %vm47, 1, 0
    %v50 = vcvt.s32.f32 %v48
    %v51 = vcvt.s32.f32 %v49
    %vm52 = vcmask 523264
    %v54 = vsel %vm52, %v50, 0
    %v57 = vsel %vm52, %v51, 0
    %59 = vmatprep.subr.mxu0 0.0
    %60 = vmatpush1.msra.mxu0 %v28
    %61 = vmatprep.subr.mxu0 0.0
    %62 = vmatpush1.msra.mxu0 %v29
    %63 = vmatprep.subr.mxu0 0.0
    %64 = vmatpush1.msra.mxu0 %v30
    %65 = vmatprep.subr.mxu0 0.0
    %66 = vmatpush1.msra.mxu0 %v31
    %67 = vmatprep.subr.mxu0 0.0
    %68 = vmatpush1.msra.mxu0 %v32
    %69 = vmatprep.subr.mxu0 0.0
    %70 = vmatpush1.msra.mxu0 %v33
    %71 = vmatprep.subr.mxu0 0.0
    %72 = vmatpush1.msra.mxu0 %v34
    %73 = vmatprep.subr.mxu0 0.0
    %74 = vmatpush1.msra.mxu0 %v35
    %75 = vmatprep.subr.mxu0 0.0
    %76 = vmatpush1.msra.mxu0 0.0
    %77 = vmatprep.subr.mxu0 0.0
    %78 = vmatpush1.msra.mxu0 0.0
    %79 = vmatprep.subr.mxu0 0.0
    %80 = vmatpush1.msra.mxu0 0.0
    %81 = vmatprep.subr.mxu0 0.0
    %82 = vmatpush1.msra.mxu0 0.0
    %83 = vmatprep.subr.mxu0 0.0
    %84 = vmatpush1.msra.mxu0 0.0
    %85 = vmatprep.subr.mxu0 0.0
    %86 = vmatpush1.msra.mxu0 0.0
    %87 = vmatprep.subr.mxu0 0.0
    %88 = vmatpush1.msra.mxu0 0.0
    %89 = vmatprep.subr.mxu0 0.0
    %90 = vmatpush1.msra.mxu0 0.0
    %91 = vmatprep.subr.mxu0 0.0
    %92 = vmatpush1.msra.mxu0 0.0
    %93 = vmatprep.subr.mxu0 0.0
    %94 = vmatpush1.msra.mxu0 0.0
    %95 = vmatprep.subr.mxu0 0.0
    %96 = vmatpush1.msra.mxu0 0.0
    %97 = vmatprep.subr.mxu0 0.0
    %98 = vmatpush1.msra.mxu0 0.0
    %99 = vmatprep.subr.mxu0 0.0
    %100 = vmatpush1.msra.mxu0 0.0
    %101 = vmatprep.subr.mxu0 0.0
    %102 = vmatpush1.msra.mxu0 0.0
    %103 = vmatprep.subr.mxu0 0.0
    %104 = vmatpush1.msra.mxu0 0.0
    %105 = vmatprep.subr.mxu0 0.0
    %106 = vmatpush1.msra.mxu0 0.0
    %107 = vmatprep.subr.mxu0 0.0
    %108 = vmatpush1.msra.mxu0 0.0
    %109 = vmatprep.subr.mxu0 0.0
    %110 = vmatpush1.msra.mxu0 0.0
    %111 = vmatprep.subr.mxu0 0.0
    %112 = vmatpush1.msra.mxu0 0.0
    %113 = vmatprep.subr.mxu0 0.0
    %114 = vmatpush1.msra.mxu0 0.0
    %115 = vmatprep.subr.mxu0 0.0
    %116 = vmatpush1.msra.mxu0 0.0
    %117 = vmatprep.subr.mxu0 0.0
    %118 = vmatpush1.msra.mxu0 0.0
    %119 = vmatprep.subr.mxu0 0.0
    %120 = vmatpush1.msra.mxu0 0.0
    %121 = vmatprep.subr.mxu0 0.0
    %122 = vmatpush1.msra.mxu0 0.0
    %123 = vmatprep.mubr.f32.mxu0 0.0
    %124 = vmatmul.mubr.f32.gmra.mrb[0].mxu0 %v54
    %v125 = vpop.f32.mrb[0].mxu0
    %v126 = vadd.f32 0.0, %v125
    %v127 = vpop.f32.mrb[0].mxu0
    %128 = vmatprep.mubr.f32.mxu0 0.0
    %129 = vmatmul.mubr.f32.gmra.mrb[0].mxu0 %v57
    %v130 = vpop.f32.mrb[0].mxu0
    %v131 = vadd.f32 0.0, %v130
    %v132 = vpop.f32.mrb[0].mxu0
    %133 = vdwg.mxu0
    %134 = vst [vmem:[#allocation4] sm:$0xff] %v126
    %135 = vst [vmem:[#allocation4 + $0x8] sm:$0xff] %v131
    // Predicated region
    $region14: #{tpu_custom_call.1} parent=1 // pred_check
      _
    $region15: #{tpu_custom_call.1} parent=1 // pred_check_branch
      %137 = sbr.rel (0) target = $region17
    $region16: #{tpu_custom_call.1} parent=1 // pred_region
      %s139 = ssub.s32 256, 256
      %140 = vsyncadd [#allocation5], %s139
      %s141 = sshll.u32 [#allocation4], 4
      %s142 = int_to_ptr.vmem [resolvable:$true] %s141
      %147 = dma.vmem_to_hbm [thread:$0]  %s142, 256, %s2, [#allocation5], 128, 128, 8
    $region17: #{tpu_custom_call.1} parent=1 // pred_fallthru
      _
    // Predicated region
    $region18: #{tpu_custom_call.1} parent=1 // pred_check
      _
    $region19: #{tpu_custom_call.1} parent=1 // pred_check_branch
      %149 = sbr.rel (0) target = $region21
    $region20: #{tpu_custom_call.1} parent=1 // pred_region
      %150 = dma.done [#allocation5], 256
    $region21: #{tpu_custom_call.1} parent=1 // pred_fallthru
      _
    %151 = vsyncpa [#allocation5], 1
  %152 = vsyncmov [#allocation3]
  %s153 = vpop.sfrf %152
  %p154 = scmp.eq.s32.totalorder %s153, 0
  %p155 = pneg %p154
  %157 = shalt.err (%p155)

</llo_original>
